<compile_context>
chip_gen: v7x
topology: tpu7x:2x2x1
jax: 0.10.0
libtpu: 0.0.40
codegen_flags: <defaults>
</compile_context>

<pallas_src>
import functools

import jax
import jax.numpy as jnp
from jax import lax
from jax.experimental import pallas as pl
from jax.experimental.pallas import tpu as pltpu


def _shifted(x, offset, axis, size, neg, idx):
    """x shifted by `offset` along `axis`; out-of-range positions filled with `neg`."""
    if offset == 0:
        return x
    rolled = pltpu.roll(x, shift=(-offset) % size, axis=axis)
    mask = (idx + offset >= 0) & (idx + offset < size)
    return jnp.where(mask, rolled, neg)


def _sp_kernel(x_ref, o_ref, *, k, p, h, w):
    # Block is (TILE, H, W): W on lanes, H on sublanes. Full H/W extent per block.
    x = x_ref[...]
    dt = x.dtype
    if jnp.issubdtype(dt, jnp.floating):
        neg = jnp.asarray(-jnp.inf, dt)
    else:
        neg = jnp.asarray(jnp.iinfo(dt).min, dt)

    # --- H (sublane) reduction first: keeps lane-axis work to one pass and only
    # k live temporaries instead of k*k. ---
    row = lax.broadcasted_iota(jnp.int32, x.shape, 1)
    hmax = x
    for d in range(k):
        o = d - p
        if o == 0:
            continue
        hmax = jnp.maximum(hmax, _shifted(x, o, 1, h, neg, row))

    # --- W (lane) reduction on the H-reduced tensor. ---
    col = lax.broadcasted_iota(jnp.int32, x.shape, 2)
    acc = hmax
    for d in range(k):
        o = d - p
        if o == 0:
            continue
        acc = jnp.maximum(acc, _shifted(hmax, o, 2, w, neg, col))

    o_ref[...] = acc


def sp_pallas(x: jax.Array, k: int = 3, s: int = 1) -> jax.Array:
    """Pallas equivalent of SP.forward: nn.MaxPool2d(kernel_size=k, stride=s, padding=k//2)."""
    # TODO(synk): only the module's default stride-1 / odd-k ("same"-size) pooling is implemented.
    assert s == 1, "only stride=1 (the SP default) is supported"
    assert k % 2 == 1, "only odd kernel sizes (padding=k//2 keeps spatial size) are supported"
    p = k // 2

    n, c, h, w = x.shape
    nc = n * c
    xr = x.reshape(nc, h, w)  # free contiguous reshape; keeps W on lanes, H on sublanes

    # Tile the collapsed N*C axis: target a few-MiB block (good HBM utilisation with
    # BlockSpec double-buffering) while keeping >= ~4 grid steps so the pipeline has
    # work to overlap and v7x can shard across its 2 TensorCores. Blocks stay well
    # under the 32 MiB scoped-VMEM default on every generation.
    plane_bytes = h * w * x.dtype.itemsize
    tile = max(1, min(nc, (4 << 20) // max(plane_bytes, 1), max(1, nc // 4)))
    while nc % tile:
        tile -= 1
    grid = (nc // tile,)

    kernel = functools.partial(_sp_kernel, k=k, p=p, h=h, w=w)

    cost = pl.CostEstimate(
        flops=2 * (k - 1) * nc * h * w,        # separable max tree: 2*(k-1) compares / element
        transcendentals=0,
        bytes_accessed=2 * nc * plane_bytes,   # memory-bound: read + write each element once
    )

    out = pl.pallas_call(
        kernel,
        out_shape=jax.ShapeDtypeStruct((nc, h, w), x.dtype),
        grid_spec=pltpu.PrefetchScalarGridSpec(
            num_scalar_prefetch=0,
            grid=grid,
            in_specs=[pl.BlockSpec((tile, h, w), lambda i: (i, 0, 0))],
            out_specs=pl.BlockSpec((tile, h, w), lambda i: (i, 0, 0)),
        ),
        compiler_params=pltpu.CompilerParams(
            dimension_semantics=("parallel",),
        ),
        cost_estimate=cost,
    )(xr)
    return out.reshape(n, c, h, w)


def _reference_sp(x: jax.Array, k: int = 3, s: int = 1) -> jax.Array:
    # Pure-JAX reference: max pool with PyTorch-style -inf padding (NCHW).
    p = k // 2
    init = -jnp.inf if jnp.issubdtype(x.dtype, jnp.floating) else jnp.iinfo(x.dtype).min
    return lax.reduce_window(
        x,
        init,
        lax.max,
        window_dimensions=(1, 1, k, k),
        window_strides=(1, 1, s, s),
        padding=((0, 0), (0, 0), (p, p), (p, p)),
    )


if __name__ == "__main__":
    key = jax.random.PRNGKey(0)
    # SP has no learnable parameters; nothing to initialize.
    x = jax.random.normal(key, (2, 4, 16, 16), dtype=jnp.float32)

    out = sp_pallas(x, k=3, s=1)
    out = jax.block_until_ready(out)

    ref = _reference_sp(x, 3, 1)
    assert out.shape == (2, 4, 16, 16), out.shape
    assert jnp.allclose(out, ref), "Pallas SP (maxpool k=3, s=1, pad=1) mismatch vs reference"

    print("KERNEL_OK")
</pallas_src>

<mosaic_0001>
module attributes {stable_mosaic.version = 11 : i64} {
  func.func @_sp_kernel(%arg0: i32, %arg1: memref<2x16x16xf32, #tpu.memory_space<vmem>>, %arg2: memref<2x16x16xf32, #tpu.memory_space<vmem>>) attributes {dimension_semantics = [#tpu.dimension_semantics<parallel>], iteration_bounds = array<i64: 4>, scalar_prefetch = 0 : i64, scratch_operands = 0 : i64, tpu.core_type = #tpu.core_type<tc>, window_params = [{transform_indices = @transform_0, window_bounds = array<i64: 2, 16, 16>}, {transform_indices = @transform_1, window_bounds = array<i64: 2, 16, 16>}]} {
    %c0 = arith.constant 0 : index
    %c0_0 = arith.constant 0 : index
    %c0_1 = arith.constant 0 : index
    %0 = vector.load %arg1[%c0, %c0_0, %c0_1] : memref<2x16x16xf32, #tpu.memory_space<vmem>>, vector<2x16x16xf32>
    %1 = tpu.iota {dimensions = array<i32: 1>} : vector<2x16x16xi32>
    %c1_i32 = arith.constant 1 : i32
    %2 = tpu.dynamic_rotate %0 by %c1_i32 dim 1 : vector<2x16x16xf32>, i32 -> vector<2x16x16xf32>
    %c-1_i32 = arith.constant -1 : i32
    %3 = vector.broadcast %c-1_i32 : i32 to vector<2x16x16xi32>
    %4 = arith.addi %1, %3 : vector<2x16x16xi32>
    %c0_i32 = arith.constant 0 : i32
    %5 = vector.broadcast %c0_i32 : i32 to vector<2x16x16xi32>
    %6 = arith.cmpi sge, %4, %5 : vector<2x16x16xi32>
    %c-1_i32_2 = arith.constant -1 : i32
    %7 = vector.broadcast %c-1_i32_2 : i32 to vector<2x16x16xi32>
    %8 = arith.addi %1, %7 : vector<2x16x16xi32>
    %c16_i32 = arith.constant 16 : i32
    %9 = vector.broadcast %c16_i32 : i32 to vector<2x16x16xi32>
    %10 = arith.cmpi slt, %8, %9 : vector<2x16x16xi32>
    %11 = arith.andi %6, %10 : vector<2x16x16xi1>
    %cst = arith.constant 0xFF800000 : f32
    %12 = vector.broadcast %cst : f32 to vector<2x16x16xf32>
    %13 = arith.select %11, %2, %12 : vector<2x16x16xi1>, vector<2x16x16xf32>
    %14 = arith.maximumf %0, %13 : vector<2x16x16xf32>
    %c15_i32 = arith.constant 15 : i32
    %15 = tpu.dynamic_rotate %0 by %c15_i32 dim 1 : vector<2x16x16xf32>, i32 -> vector<2x16x16xf32>
    %c1_i32_3 = arith.constant 1 : i32
    %16 = vector.broadcast %c1_i32_3 : i32 to vector<2x16x16xi32>
    %17 = arith.addi %1, %16 : vector<2x16x16xi32>
    %c0_i32_4 = arith.constant 0 : i32
    %18 = vector.broadcast %c0_i32_4 : i32 to vector<2x16x16xi32>
    %19 = arith.cmpi sge, %17, %18 : vector<2x16x16xi32>
    %c1_i32_5 = arith.constant 1 : i32
    %20 = vector.broadcast %c1_i32_5 : i32 to vector<2x16x16xi32>
    %21 = arith.addi %1, %20 : vector<2x16x16xi32>
    %c16_i32_6 = arith.constant 16 : i32
    %22 = vector.broadcast %c16_i32_6 : i32 to vector<2x16x16xi32>
    %23 = arith.cmpi slt, %21, %22 : vector<2x16x16xi32>
    %24 = arith.andi %19, %23 : vector<2x16x16xi1>
    %cst_7 = arith.constant 0xFF800000 : f32
    %25 = vector.broadcast %cst_7 : f32 to vector<2x16x16xf32>
    %26 = arith.select %24, %15, %25 : vector<2x16x16xi1>, vector<2x16x16xf32>
    %27 = arith.maximumf %14, %26 : vector<2x16x16xf32>
    %28 = tpu.iota {dimensions = array<i32: 2>} : vector<2x16x16xi32>
    %c1_i32_8 = arith.constant 1 : i32
    %29 = tpu.dynamic_rotate %27 by %c1_i32_8 dim 2 : vector<2x16x16xf32>, i32 -> vector<2x16x16xf32>
    %c-1_i32_9 = arith.constant -1 : i32
    %30 = vector.broadcast %c-1_i32_9 : i32 to vector<2x16x16xi32>
    %31 = arith.addi %28, %30 : vector<2x16x16xi32>
    %c0_i32_10 = arith.constant 0 : i32
    %32 = vector.broadcast %c0_i32_10 : i32 to vector<2x16x16xi32>
    %33 = arith.cmpi sge, %31, %32 : vector<2x16x16xi32>
    %c-1_i32_11 = arith.constant -1 : i32
    %34 = vector.broadcast %c-1_i32_11 : i32 to vector<2x16x16xi32>
    %35 = arith.addi %28, %34 : vector<2x16x16xi32>
    %c16_i32_12 = arith.constant 16 : i32
    %36 = vector.broadcast %c16_i32_12 : i32 to vector<2x16x16xi32>
    %37 = arith.cmpi slt, %35, %36 : vector<2x16x16xi32>
    %38 = arith.andi %33, %37 : vector<2x16x16xi1>
    %cst_13 = arith.constant 0xFF800000 : f32
    %39 = vector.broadcast %cst_13 : f32 to vector<2x16x16xf32>
    %40 = arith.select %38, %29, %39 : vector<2x16x16xi1>, vector<2x16x16xf32>
    %41 = arith.maximumf %27, %40 : vector<2x16x16xf32>
    %c15_i32_14 = arith.constant 15 : i32
    %42 = tpu.dynamic_rotate %27 by %c15_i32_14 dim 2 : vector<2x16x16xf32>, i32 -> vector<2x16x16xf32>
    %c1_i32_15 = arith.constant 1 : i32
    %43 = vector.broadcast %c1_i32_15 : i32 to vector<2x16x16xi32>
    %44 = arith.addi %28, %43 : vector<2x16x16xi32>
    %c0_i32_16 = arith.constant 0 : i32
    %45 = vector.broadcast %c0_i32_16 : i32 to vector<2x16x16xi32>
    %46 = arith.cmpi sge, %44, %45 : vector<2x16x16xi32>
    %c1_i32_17 = arith.constant 1 : i32
    %47 = vector.broadcast %c1_i32_17 : i32 to vector<2x16x16xi32>
    %48 = arith.addi %28, %47 : vector<2x16x16xi32>
    %c16_i32_18 = arith.constant 16 : i32
    %49 = vector.broadcast %c16_i32_18 : i32 to vector<2x16x16xi32>
    %50 = arith.cmpi slt, %48, %49 : vector<2x16x16xi32>
    %51 = arith.andi %46, %50 : vector<2x16x16xi1>
    %cst_19 = arith.constant 0xFF800000 : f32
    %52 = vector.broadcast %cst_19 : f32 to vector<2x16x16xf32>
    %53 = arith.select %51, %42, %52 : vector<2x16x16xi1>, vector<2x16x16xf32>
    %54 = arith.maximumf %41, %53 : vector<2x16x16xf32>
    %c0_20 = arith.constant 0 : index
    %c0_21 = arith.constant 0 : index
    %c0_22 = arith.constant 0 : index
    %55 = vector.load %arg2[%c0_20, %c0_21, %c0_22] : memref<2x16x16xf32, #tpu.memory_space<vmem>>, vector<2x16x16xf32>
    tpu.vector_store %arg2[%c0_20, %c0_21, %c0_22], %54 {strides = array<i32>} : memref<2x16x16xf32, #tpu.memory_space<vmem>>, vector<2x16x16xf32>,
    return
  }
  func.func @transform_0(%arg0: i32) -> (i32, i32, i32) {
    %c0_i32 = arith.constant 0 : i32
    %c0_i32_0 = arith.constant 0 : i32
    %c0_i32_1 = arith.constant 0 : i32
    return %arg0, %c0_i32, %c0_i32_0 : i32, i32, i32
  }
  func.func @transform_1(%arg0: i32) -> (i32, i32, i32) {
    %c0_i32 = arith.constant 0 : i32
    %c0_i32_0 = arith.constant 0 : i32
    %c0_i32_1 = arith.constant 0 : i32
    return %arg0, %c0_i32, %c0_i32_0 : i32, i32, i32
  }
}

</mosaic_0001>

<llo_original>
// kernel: tpu_custom_call.1
$region0: #{tpu_custom_call.1}
  #allocation0 [shape = 'u32[]', space=smem, size = 0x4, offset = 0x4, fixed_abs, tag = 'smem constant byte address 0x4 - core index']
  #allocation1 [shape = 'u32[144,128]{1,0:T(1,128)}', space=vmem, size = 0x12000, scoped, tag = 'internal scratch']
  %s0 = inlined_call_operand.hbm [shape: f32[8,16,16], index: 0, kind: input, shape index: {}]
  %s1 = inlined_call_operand.hbm [shape: f32[8,16,16], index: 1, kind: output, shape index: {}]
  %s2 = sld [smem:[#allocation0]]
  $region41: #{tpu_custom_call.1} parent=0
    _
  %s4 = ssub.s32 1, %s2
  %s5 = scalar_select 0, %s4, %s2
  $region1: #{tpu_custom_call.1} parent=0
    #allocation2 [shape = 'u8[32768]{0}', space=vmem, size = 0x8000, scoped, tag = 'input window, operand 0']
    #allocation3 [shape = 's32[2]{0}', space=sflag, size = 0x8, scoped, tag = 'scoped memory for tpu_custom_call.1']
    #allocation4 [shape = 's32[2]{0}', space=sflag, size = 0x8, scoped, tag = 'scoped memory for tpu_custom_call.1']
    #allocation5 [shape = 'u8[32768]{0}', space=vmem, size = 0x8000, scoped, tag = 'output window, operand 0']
    %6 = vsyncpa [#allocation3], 0
    %s7 = scalar_lea.sflag [#allocation3], 1
    %8 = vsyncpa %s7, 0
    %9 = vsyncpa [#allocation4], 0
    %s10 = scalar_lea.sflag [#allocation4], 1
    %11 = vsyncpa %s10, 0
    loop: start=0, step=1, limit=6
    $region2: #{tpu_custom_call.1} parent=1 // loop_pre_header
      _
    $region3: #{tpu_custom_call.1} parent=1 // loop_header
      %s13 = sphi 0, %s17
      %p14 = scmp.ge.s32.totalorder %s13, 6
      %s23 = sphi 0, %s25
      %s26 = sphi 0, %s23
      %s27 = sphi 0, %s26
      %s43 = sphi 0, %s27
      %s49 = sphi 0, %s51
      %s52 = sphi 0, %s49
      %s53 = sphi 0, %s52
      %s69 = sphi 0, %s53
    $region4: #{tpu_custom_call.1} parent=1 // loop_header_branch
      %16 = sbr.rel (%p14) target = $region8
    $region5: #{tpu_custom_call.1} parent=1 // loop_body
      %s18 = ssub.s32 %s13, 1
      %s19 = ssub.s32 %s13, 2
      %s20 = sadd.s32 %s13, 1
      %s21 = ssub.s32 %s13, %s20
      %p22 = scmp.eq.s32.totalorder %s21, 0
      %s24 = sadd.s32 %s23, 1
      %s25 = scalar_select %p22, %s23, %s24
      %p28 = pneg %p22
      %p29 = scmp.eq.s32.totalorder %s13, 3
      %p30 = por %p28, %p29
      %p31 = scmp.ne.s32.totalorder %s23, %s26
      %p32 = scmp.eq.s32.totalorder %s13, 0
      %p33 = por %p31, %p32
      %p34 = scmp.ne.s32.totalorder %s23, %s26
      %p35 = scmp.eq.s32.totalorder %s18, 3
      %p36 = por %p34, %p35
      %p37 = scmp.ne.s32.totalorder %s26, %s27
      %p38 = scmp.eq.s32.totalorder %s18, 0
      %p39 = por %p37, %p38
      %p40 = scmp.ne.s32.totalorder %s26, %s27
      %p41 = scmp.eq.s32.totalorder %s19, 3
      %p42 = por %p40, %p41
      %p44 = scmp.ne.s32.totalorder %s27, %s43
      %p45 = scmp.eq.s32.totalorder %s19, 0
      %p46 = por %p44, %p45
      %s47 = ssub.s32 %s13, %s20
      %p48 = scmp.eq.s32.totalorder %s47, 0
      %s50 = sadd.s32 %s49, 1
      %s51 = scalar_select %p48, %s49, %s50
      %p54 = pneg %p48
      %p55 = scmp.eq.s32.totalorder %s13, 3
      %p56 = por %p54, %p55
      %p57 = scmp.ne.s32.totalorder %s49, %s52
      %p58 = scmp.eq.s32.totalorder %s13, 0
      %p59 = por %p57, %p58
      %p60 = scmp.ne.s32.totalorder %s49, %s52
      %p61 = scmp.eq.s32.totalorder %s18, 3
      %p62 = por %p60, %p61
      %p63 = scmp.ne.s32.totalorder %s52, %s53
      %p64 = scmp.eq.s32.totalorder %s18, 0
      %p65 = por %p63, %p64
      %p66 = scmp.ne.s32.totalorder %s52, %s53
      %p67 = scmp.eq.s32.totalorder %s19, 3
      %p68 = por %p66, %p67
      %p70 = scmp.ne.s32.totalorder %s53, %s69
      %p71 = scmp.eq.s32.totalorder %s19, 0
      %p72 = por %p70, %p71
      %p73 = scmp.le.s32.totalorder 1, %s13
      %p74 = scmp.lt.s32.totalorder %s13, 5
      %p75 = pnand %p73, %p74
      %p76 = pneg %p75
      // Predicated region
      $region9: #{tpu_custom_call.1} parent=5 // pred_check
        _
      $region10: #{tpu_custom_call.1} parent=5 // pred_check_branch
        %78 = sbr.rel (%p75) target = $region12
      $region11: #{tpu_custom_call.1} parent=5 // pred_region
        %s79 = ssub.s32 %s13, 1
      $region12: #{tpu_custom_call.1} parent=5 // pred_fallthru
        _
      %p80 = scmp.lt.s32.totalorder %s13, 4
      // Predicated region
      $region13: #{tpu_custom_call.1} parent=5 // pred_check
        %p81 = pneg %p80
      $region14: #{tpu_custom_call.1} parent=5 // pred_check_branch
        %83 = sbr.rel (%p81) target = $region16
      $region15: #{tpu_custom_call.1} parent=5 // pred_region
        // Predicated region
        $region17: #{tpu_custom_call.1} parent=15 // pred_check
          %p84 = pneg %p33
        $region18: #{tpu_custom_call.1} parent=15 // pred_check_branch
          %86 = sbr.rel (%p84) target = $region20
        $region19: #{tpu_custom_call.1} parent=15 // pred_region
          %s87 = sand.u32 %s23, 1
          %s88 = scalar_lea.sflag [#allocation3], %s87
          %s89 = sand.u32 %s23, 1
          %s90 = smul.addr %s89, 32
          %s91 = scalar_lea.vmem [#allocation2], %s90
          %s92 = smul.u32 2, %s13
          %s94 = ssub.s32 512, 512
          %95 = vsyncadd %s88, %s94
          %s96 = smul.addr %s92, 2
          %s97 = smul.addr %s96, 128
          %s98 = scalar_lea.hbm %s0, %s97
          %s99 = sshll.u32 %s91, 4
          %s100 = int_to_ptr.vmem [resolvable:$true] %s99
          %105 = dma.hbm_to_vmem [thread:$0]  %s98, 512, %s100, %s88, 128, 128, 8
        $region20: #{tpu_custom_call.1} parent=15 // pred_fallthru
          _
      $region16: #{tpu_custom_call.1} parent=5 // pred_fallthru
        _
      %p106 = scmp.le.s32.totalorder 1, %s13
      %p107 = scmp.lt.s32.totalorder %s13, 5
      %p108 = pnand %p106, %p107
      %p109 = pneg %p108
      // Predicated region
      $region21: #{tpu_custom_call.1} parent=5 // pred_check
        _
      $region22: #{tpu_custom_call.1} parent=5 // pred_check_branch
        %111 = sbr.rel (%p108) target = $region24
      $region23: #{tpu_custom_call.1} parent=5 // pred_region
        %s112 = ssub.s32 %s13, 1
        %s113 = sand.u32 %s26, 1
        %s114 = scalar_lea.sflag [#allocation3], %s113
        %s115 = sand.u32 %s26, 1
        %s116 = smul.addr %s115, 32
        %s117 = scalar_lea.vmem [#allocation2], %s116
        // Predicated region
        $region25: #{tpu_custom_call.1} parent=23 // pred_check
          %p118 = pneg %p39
        $region26: #{tpu_custom_call.1} parent=23 // pred_check_branch
          %120 = sbr.rel (%p118) target = $region28
        $region27: #{tpu_custom_call.1} parent=23 // pred_region
          %121 = dma.done %s114, 512
        $region28: #{tpu_custom_call.1} parent=23 // pred_fallthru
          _
        %s122 = sand.u32 %s26, 1
        %s123 = scalar_lea.sflag [#allocation3], %s122
        %s124 = sand.u32 %s26, 1
        %s125 = smul.addr %s124, 32
        %s126 = scalar_lea.vmem [#allocation2], %s125
        %p127 = pneg %p39
        %p128 = pneg %p36
        %p129 = pneg %p65
        %p130 = pneg %p62
        %s131 = sand.u32 %s52, 1
        %s132 = scalar_lea.sflag [#allocation4], %s131
        %s133 = sand.u32 %s52, 1
        %s134 = smul.addr %s133, 32
        %s135 = scalar_lea.vmem [#allocation5], %s134
        %s136 = smul.u32 2, %s18
        %s137 = smul.u32 2, %s18
        %v138 = vld [vmem:[%s117] sm:$0xff]
        %v139 = vld [vmem:[%s117 + $0x8] sm:$0xff]
        %v140 = vld [vmem:[%s117 + $0x10] sm:$0xff]
        %v141 = vld [vmem:[%s117 + $0x18] sm:$0xff]
        %v142 = vlaneseq
        %v143 = vshrl.u32 %v142, 7
        %v144 = vadd.s32 %v143, 8
        %v145 = vrot.slane %v138, 7
        %v146 = vrot.slane %v140, 7
        %v147 = vrot.slane %v139, 7
        %v148 = vrot.slane %v141, 7
        %vm149 = vcmp.lt.s32.totalorder %v143, 1
        %v150 = vsel %vm149, %v145, %v147
        %v151 = vsel %vm149, %v146, %v148
        %v152 = vsel %vm149, %v147, %v145
        %v153 = vsel %vm149, %v148, %v146
        %v154 = vadd.s32 %v143, 4294967295
        %v155 = vadd.s32 %v144, 4294967295
        %vm156 = vcmp.ge.s32.totalorder %v154, 0
        %vm157 = vcmp.ge.s32.totalorder %v155, 0
        %vm158 = vcmp.lt.s32.totalorder %v154, 16
        %vm159 = vcmp.lt.s32.totalorder %v155, 16
        %vm160 = vmand %vm156, %vm158
        %vm161 = vmand %vm157, %vm159
        %v162 = vsel %vm160, %v152, -inf
        %v163 = vsel %vm161, %v150, -inf
        %v164 = vsel %vm160, %v153, -inf
        %v165 = vsel %vm161, %v151, -inf
        %v166 = vmax.f32 %v138, %v162
        %v167 = vmax.f32 %v139, %v163
        %v168 = vmax.f32 %v140, %v164
        %v169 = vmax.f32 %v141, %v165
        %v170 = vrot.slane %v138, 1
        %v171 = vrot.slane %v140, 1
        %v172 = vrot.slane %v139, 1
        %v173 = vrot.slane %v141, 1
        %vm174 = vcmp.lt.s32.totalorder %v143, 7
        %v175 = vsel %vm174, %v170, %v172
        %v176 = vsel %vm174, %v171, %v173
        %v177 = vsel %vm174, %v172, %v170
        %v178 = vsel %vm174, %v173, %v171
        %v179 = vadd.s32 %v143, 1
        %v180 = vadd.s32 %v144, 1
        %vm181 = vcmp.ge.s32.totalorder %v179, 0
        %vm182 = vcmp.ge.s32.totalorder %v180, 0
        %vm183 = vcmp.lt.s32.totalorder %v179, 16
        %vm184 = vcmp.lt.s32.totalorder %v180, 16
        %vm185 = vmand %vm181, %vm183
        %vm186 = vmand %vm182, %vm184
        %v187 = vsel %vm185, %v175, -inf
        %v188 = vsel %vm186, %v177, -inf
        %v189 = vsel %vm185, %v176, -inf
        %v190 = vsel %vm186, %v178, -inf
        %v191 = vmax.f32 %v166, %v187
        %v192 = vmax.f32 %v167, %v188
        %v193 = vmax.f32 %v168, %v189
        %v194 = vmax.f32 %v169, %v190
        %v195 = vlaneseq
        %v196 = vand.u32 %v195, 127
        %vm197 = vcmask 1047680
        %198 = vrot.lane.b32.xlu0 %v191, 16
        %v199 = vpop.permute.xlu0 %198
        %v200 = vsel %vm197, %v199, %v191
        %201 = vrot.lane.b32.xlu0 %v192, 16
        %v202 = vpop.permute.xlu0 %201
        %v203 = vsel %vm197, %v202, %v192
        %204 = vrot.lane.b32.xlu0 %v193, 16
        %v205 = vpop.permute.xlu0 %204
        %v206 = vsel %vm197, %v205, %v193
        %207 = vrot.lane.b32.xlu0 %v194, 16
        %v208 = vpop.permute.xlu0 %207
        %v209 = vsel %vm197, %v208, %v194
        %210 = vrot.lane.b32.xlu0 %v200, 16
        %v211 = vpop.permute.xlu0 %210
        %212 = vrot.lane.b32.xlu0 %v203, 16
        %v213 = vpop.permute.xlu0 %212
        %214 = vrot.lane.b32.xlu0 %v206, 16
        %v215 = vpop.permute.xlu0 %214
        %216 = vrot.lane.b32.xlu0 %v209, 16
        %v217 = vpop.permute.xlu0 %216
        %v218 = vsel %vm197, %v211, %v191
        %v219 = vsel %vm197, %v213, %v192
        %v220 = vsel %vm197, %v215, %v193
        %v221 = vsel %vm197, %v217, %v194
        %v222 = vadd.s32 %v196, 4294967295
        %vm223 = vcmp.ge.s32.totalorder %v222, 0
        %vm224 = vcmp.lt.s32.totalorder %v222, 16
        %vm225 = vmand %vm223, %vm224
        %230 = vrot.lane.b32.xlu0 %v218, 113
        %v231 = vpop.permute.xlu0 %230
        %232 = vrot.lane.b32.xlu0 %v219, 113
        %v233 = vpop.permute.xlu0 %232
        %234 = vrot.lane.b32.xlu0 %v220, 113
        %v235 = vpop.permute.xlu0 %234
        %236 = vrot.lane.b32.xlu0 %v221, 113
        %v237 = vpop.permute.xlu0 %236
        %v242 = vsel %vm225, %v231, -inf
        %v243 = vsel %vm225, %v233, -inf
        %v244 = vsel %vm225, %v235, -inf
        %v245 = vsel %vm225, %v237, -inf
        %v246 = vmax.f32 %v191, %v242
        %v247 = vmax.f32 %v192, %v243
        %v248 = vmax.f32 %v193, %v244
        %v249 = vmax.f32 %v194, %v245
        %v250 = vadd.s32 %v196, 1
        %vm251 = vcmp.ge.s32.totalorder %v250, 0
        %vm252 = vcmp.lt.s32.totalorder %v250, 16
        %vm253 = vmand %vm251, %vm252
        %254 = vrot.lane.b32.xlu0 %v218, 127
        %v255 = vpop.permute.xlu0 %254
        %256 = vrot.lane.b32.xlu0 %v219, 127
        %v257 = vpop.permute.xlu0 %256
        %258 = vrot.lane.b32.xlu0 %v220, 127
        %v259 = vpop.permute.xlu0 %258
        %260 = vrot.lane.b32.xlu0 %v221, 127
        %v261 = vpop.permute.xlu0 %260
        %v266 = vsel %vm253, %v255, -inf
        %v267 = vsel %vm253, %v257, -inf
        %v268 = vsel %vm253, %v259, -inf
        %v269 = vsel %vm253, %v261, -inf
        %v270 = vmax.f32 %v246, %v266
        %v271 = vmax.f32 %v247, %v267
        %v272 = vmax.f32 %v248, %v268
        %v273 = vmax.f32 %v249, %v269
        %vm274 = vcmask 130048
        %275 = vst.msk [vmem:[%s135] sm:$0xff] %vm274, %v270
        %276 = vst.msk [vmem:[%s135 + $0x8] sm:$0xff] %vm274, %v271
        %277 = vst.msk [vmem:[%s135 + $0x10] sm:$0xff] %vm274, %v272
        %278 = vst.msk [vmem:[%s135 + $0x18] sm:$0xff] %vm274, %v273
        %s279 = sand.u32 %s52, 1
        %s280 = scalar_lea.sflag [#allocation4], %s279
        %s281 = sand.u32 %s52, 1
        %s282 = smul.addr %s281, 32
        %s283 = scalar_lea.vmem [#allocation5], %s282
        // Predicated region
        $region29: #{tpu_custom_call.1} parent=23 // pred_check
          %p284 = pneg %p62
        $region30: #{tpu_custom_call.1} parent=23 // pred_check_branch
          %286 = sbr.rel (%p284) target = $region32
        $region31: #{tpu_custom_call.1} parent=23 // pred_region
          %s287 = smul.u32 2, %s18
          %s289 = ssub.s32 512, 512
          %290 = vsyncadd %s280, %s289
          %s291 = smul.addr %s287, 2
          %s292 = smul.addr %s291, 128
          %s293 = scalar_lea.hbm %s1, %s292
          %s294 = sshll.u32 %s283, 4
          %s295 = int_to_ptr.vmem [resolvable:$true] %s294
          %300 = dma.vmem_to_hbm [thread:$0]  %s295, 512, %s293, %s280, 128, 128, 8
        $region32: #{tpu_custom_call.1} parent=23 // pred_fallthru
          _
      $region24: #{tpu_custom_call.1} parent=5 // pred_fallthru
        _
      %p301 = scmp.le.s32.totalorder 2, %s13
      // Predicated region
      $region33: #{tpu_custom_call.1} parent=5 // pred_check
        %p302 = pneg %p301
      $region34: #{tpu_custom_call.1} parent=5 // pred_check_branch
        %304 = sbr.rel (%p302) target = $region36
      $region35: #{tpu_custom_call.1} parent=5 // pred_region
        %s305 = ssub.s32 %s13, 2
        // Predicated region
        $region37: #{tpu_custom_call.1} parent=35 // pred_check
          %p306 = pneg %p68
        $region38: #{tpu_custom_call.1} parent=35 // pred_check_branch
          %308 = sbr.rel (%p306) target = $region40
        $region39: #{tpu_custom_call.1} parent=35 // pred_region
          %s309 = sand.u32 %s53, 1
          %s310 = scalar_lea.sflag [#allocation4], %s309
          %s311 = sand.u32 %s53, 1
          %s312 = smul.addr %s311, 32
          %s313 = scalar_lea.vmem [#allocation5], %s312
          %314 = dma.done %s310, 512
        $region40: #{tpu_custom_call.1} parent=35 // pred_fallthru
          _
      $region36: #{tpu_custom_call.1} parent=5 // pred_fallthru
        _
    $region6: #{tpu_custom_call.1} parent=1 // loop_footer
      %s17 = sadd.s32 1, %s13
    $region7: #{tpu_custom_call.1} parent=1 // loop_footer_branch
      %12 = sbr.rel target = $region3
    $region8: #{tpu_custom_call.1} parent=1 // loop_exit
      _
    %315 = vsyncpa [#allocation3], 1
    %s316 = scalar_lea.sflag [#allocation3], 1
    %317 = vsyncpa %s316, 1
    %318 = vsyncpa [#allocation4], 1
    %s319 = scalar_lea.sflag [#allocation4], 1
    %320 = vsyncpa %s319, 1

</llo_original>
